<compile_context>
chip_gen: v5e
topology: v5e:2x2
jax: 0.10.0
libtpu: 0.0.40
codegen_flags: <defaults>
</compile_context>

<pallas_src>
import functools
import math

import jax
import jax.numpy as jnp
from jax import lax
from jax.experimental import pallas as pl
from jax.experimental.pallas import tpu as pltpu

LANE = 128       # pad hidden/output feature dims to a multiple of this (lane-dense)
SUBLANE = 16     # bf16 native sublane packing for the batch (second-to-last) dim
TB_MAX = 4096    # max batch-tile rows


def _round_up(n, m):
    return ((n + m - 1) // m) * m


def _exact_gelu(x):
    # PyTorch F.gelu (approximate='none'): 0.5 * x * (1 + erf(x / sqrt(2)))
    return 0.5 * x * (1.0 + lax.erf(x * (1.0 / math.sqrt(2.0))))


def _layer_dims(layer_value):
    """Per-layer (fan_in, fan_out) as the kernel sees them.

    The first fan_in stays unpadded (it is streamed from HBM every grid step);
    hidden/output feature dims are padded to a multiple of 128 so weight tiles
    and the output block are lane-dense (unmasked vst, full MXU tiles).
    """
    num_layers = len(layer_value) - 1
    in_dims = [layer_value[0]] + [_round_up(d, LANE) for d in layer_value[1:-1]]
    out_dims = [_round_up(d, LANE) for d in layer_value[1:]]
    assert len(in_dims) == len(out_dims) == num_layers
    return in_dims, out_dims


def _make_mlp_kernel(num_layers):
    """Fused MLP kernel. Ref order: (x, w0, b0, ..., w_{L-1}, b_{L-1}, out)."""

    def kernel(*refs):
        x_ref = refs[0]
        out_ref = refs[-1]
        param_refs = refs[1:-1]

        # Input tile is unpadded f32 in HBM; cast to bf16 here so the wrapper
        # never spends an extra HBM pass on pad/cast of the activations.
        h = x_ref[...].astype(jnp.bfloat16)
        for i in range(num_layers):
            w = param_refs[2 * i][...]        # (Fin, Fout_p) bf16, VMEM-resident
            b = param_refs[2 * i + 1][...]    # (1,   Fout_p) f32
            # bf16 MXU matmul, f32 accumulate; post-matmul math stays f32.
            acc = jnp.dot(h, w, preferred_element_type=jnp.float32) + b
            if i < num_layers - 1:
                # TODO(synk): nn.Dropout(p=0.2) is identity in eval mode; training-time
                # stochastic dropout (with PyTorch-identical RNG) is not reproduced.
                h = _exact_gelu(acc).astype(jnp.bfloat16)
            else:
                h = jnp.maximum(acc, 0.0)     # torch.relu on the final layer (f32)
        out_ref[...] = h.astype(out_ref.dtype)

    return kernel


def init_net_params(layer_value, key):
    """Deterministic parameter init mirroring the PyTorch module __init__."""
    params = []
    for i in range(len(layer_value) - 1):
        fan_in, fan_out = layer_value[i], layer_value[i + 1]
        key, kw, kb = jax.random.split(key, 3)
        w_bound = math.sqrt(6.0 / (fan_in + fan_out))       # xavier_uniform_
        w = jax.random.uniform(kw, (fan_in, fan_out), minval=-w_bound,
                               maxval=w_bound, dtype=jnp.float32)
        b_bound = 1.0 / math.sqrt(fan_in)                   # nn.Linear default bias
        b = jax.random.uniform(kb, (1, fan_out), minval=-b_bound,
                               maxval=b_bound, dtype=jnp.float32)
        params.append((w, b))
    return params


def pad_net_params(params, layer_value):
    """Zero-pad hidden/output feature dims to 128 multiples; weights->bf16, bias->f32.

    Zero padding keeps padded lanes exactly zero through bias-add, GELU and ReLU,
    so cropping the final output recovers the unpadded result.
    """
    in_dims, out_dims = _layer_dims(layer_value)
    flat = []
    for i, (w, b) in enumerate(params):
        wp = jnp.zeros((in_dims[i], out_dims[i]), jnp.bfloat16)
        wp = wp.at[: w.shape[0], : w.shape[1]].set(w.astype(jnp.bfloat16))
        bp = jnp.zeros((1, out_dims[i]), jnp.float32)
        bp = bp.at[:, : b.shape[1]].set(b)
        flat.extend((wp, bp))
    return tuple(flat)


@functools.partial(jax.jit, static_argnames=("layer_value",))
def net_forward(x, flat_padded_params, layer_value):
    """Full MLP forward in a single batch-tiled Pallas kernel."""
    num_layers = len(layer_value) - 1
    in_dims, out_dims = _layer_dims(layer_value)
    batch, f0 = x.shape
    assert f0 == layer_value[0]

    # --- Batch tiling --------------------------------------------------------
    batch_r = _round_up(batch, SUBLANE)
    tb = min(TB_MAX, batch_r)
    # Keep >=2 grid steps when the batch allows it, so dimension_semantics
    # ("parallel",) can shard the grid across both v7x TensorCores.
    if batch_r > SUBLANE and batch_r // tb < 2:
        tb = max(SUBLANE, _round_up(pl.cdiv(batch_r, 2), SUBLANE))
    batch_p = _round_up(batch, tb)
    grid = (batch_p // tb,)

    # Pad only the batch dim (no feature padding / dtype cast in the wrapper).
    if batch_p != batch:
        x_in = jnp.pad(x, ((0, batch_p - batch), (0, 0)))
    else:
        x_in = x

    in_specs = [pl.BlockSpec((tb, f0), lambda i: (i, 0))]
    for li in range(num_layers):
        # Constant index_map -> weights/biases stay VMEM-resident across steps.
        in_specs.append(pl.BlockSpec((in_dims[li], out_dims[li]), lambda i: (0, 0)))
        in_specs.append(pl.BlockSpec((1, out_dims[li]), lambda i: (0, 0)))
    out_spec = pl.BlockSpec((tb, out_dims[-1]), lambda i: (i, 0))

    # --- VMEM budget (sized for v7x's 64 MiB; also valid on v5e/v6e) ---------
    weight_bytes = sum(
        in_dims[li] * out_dims[li] * 2 + out_dims[li] * 4 for li in range(num_layers)
    )
    tile_bytes = tb * f0 * 4 + tb * out_dims[-1] * 2
    resident = 2 * (weight_bytes + tile_bytes)     # Pallas double-buffers operands
    temps = 4 * tb * max(out_dims) * 4             # headroom for f32 intermediates
    assert resident + temps < 48 * 1024 * 1024, (
        "layer widths / batch tile too large for the VMEM-resident weight strategy")
    vmem_limit = int(min(max(resident + temps + (4 << 20), 16 << 20), 48 << 20))

    flops = 2 * batch_p * sum(in_dims[li] * out_dims[li] for li in range(num_layers))
    transcendentals = batch_p * sum(out_dims[:-1])          # erf per hidden element
    bytes_accessed = batch_p * f0 * 4 + weight_bytes + batch_p * out_dims[-1] * 2

    out_p = pl.pallas_call(
        _make_mlp_kernel(num_layers),
        out_shape=jax.ShapeDtypeStruct((batch_p, out_dims[-1]), jnp.bfloat16),
        grid=grid,
        in_specs=in_specs,
        out_specs=out_spec,
        compiler_params=pltpu.CompilerParams(
            dimension_semantics=("parallel",),
            vmem_limit_bytes=vmem_limit,
        ),
        cost_estimate=pl.CostEstimate(
            flops=int(flops),
            transcendentals=int(transcendentals),
            bytes_accessed=int(bytes_accessed),
        ),
    )(x_in, *flat_padded_params)

    # Crop padded batch rows / output lanes; only the tiny real slice is cast to f32.
    return out_p[:batch, : layer_value[-1]].astype(jnp.float32)


def net_forward_ref_f32(x, params):
    """Pure-f32 JAX reference (PyTorch-equivalent math)."""
    h = x
    for i, (w, b) in enumerate(params):
        h = h @ w + b
        if i < len(params) - 1:
            h = jax.nn.gelu(h, approximate=False)           # dropout identity (eval)
        else:
            h = jnp.maximum(h, 0.0)
    return h


def net_forward_ref_mirror(x, params):
    """Reference mirroring the kernel's precision (bf16 matmul/output, f32 acc)."""
    h = x.astype(jnp.bfloat16)
    for i, (w, b) in enumerate(params):
        h = jnp.dot(h, w.astype(jnp.bfloat16),
                    preferred_element_type=jnp.float32) + b
        if i < len(params) - 1:
            h = _exact_gelu(h).astype(jnp.bfloat16)
        else:
            h = jnp.maximum(h, 0.0)
    return h.astype(jnp.bfloat16).astype(jnp.float32)


if __name__ == "__main__":
    # Small shapes consistent with the module: layer_value defines the MLP widths.
    layer_value = (32, 64, 64, 8)
    batch = 16

    key = jax.random.PRNGKey(0)
    key, kx = jax.random.split(key)
    x = jax.random.normal(kx, (batch, layer_value[0]), dtype=jnp.float32)

    params = init_net_params(layer_value, key)
    flat_padded = pad_net_params(params, layer_value)

    out = net_forward(x, flat_padded, layer_value)
    out = jax.block_until_ready(out)

    assert out.shape == (batch, layer_value[-1]), out.shape

    # Tight check vs a precision-mirrored reference.
    ref_mirror = net_forward_ref_mirror(x, params)
    assert jnp.allclose(out, ref_mirror, atol=5e-3, rtol=5e-3), float(
        jnp.max(jnp.abs(out - ref_mirror)))

    # Looser semantic check vs the full-f32 PyTorch-equivalent reference.
    ref_f32 = net_forward_ref_f32(x, params)
    assert jnp.allclose(out, ref_f32, atol=5e-2, rtol=5e-2), float(
        jnp.max(jnp.abs(out - ref_f32)))

    print("KERNEL_OK")
</pallas_src>

<mosaic_0001>
module attributes {stable_mosaic.version = 11 : i64} {
  func.func @kernel(%arg0: i32, %arg1: memref<16x32xf32, #tpu.memory_space<vmem>>, %arg2: memref<32x128xbf16, #tpu.memory_space<vmem>>, %arg3: memref<1x128xf32, #tpu.memory_space<vmem>>, %arg4: memref<128x128xbf16, #tpu.memory_space<vmem>>, %arg5: memref<1x128xf32, #tpu.memory_space<vmem>>, %arg6: memref<128x128xbf16, #tpu.memory_space<vmem>>, %arg7: memref<1x128xf32, #tpu.memory_space<vmem>>, %arg8: memref<16x128xbf16, #tpu.memory_space<vmem>>) attributes {dimension_semantics = [#tpu.dimension_semantics<parallel>], iteration_bounds = array<i64: 1>, scalar_prefetch = 0 : i64, scratch_operands = 0 : i64, tpu.core_type = #tpu.core_type<tc>, window_params = [{transform_indices = @transform_0, window_bounds = array<i64: 16, 32>}, {pipeline_mode = #tpu.pipeline_mode<synchronous>, transform_indices = @transform_1, window_bounds = array<i64: 32, 128>}, {pipeline_mode = #tpu.pipeline_mode<synchronous>, transform_indices = @transform_2, window_bounds = array<i64: 1, 128>}, {pipeline_mode = #tpu.pipeline_mode<synchronous>, transform_indices = @transform_3, window_bounds = array<i64: 128, 128>}, {pipeline_mode = #tpu.pipeline_mode<synchronous>, transform_indices = @transform_4, window_bounds = array<i64: 1, 128>}, {pipeline_mode = #tpu.pipeline_mode<synchronous>, transform_indices = @transform_5, window_bounds = array<i64: 128, 128>}, {pipeline_mode = #tpu.pipeline_mode<synchronous>, transform_indices = @transform_6, window_bounds = array<i64: 1, 128>}, {transform_indices = @transform_7, window_bounds = array<i64: 16, 128>}]} {
    %c0 = arith.constant 0 : index
    %c0_0 = arith.constant 0 : index
    %0 = vector.load %arg1[%c0, %c0_0] : memref<16x32xf32, #tpu.memory_space<vmem>>, vector<16x32xf32>
    %1 = arith.truncf %0 : vector<16x32xf32> to vector<16x32xbf16>
    %c0_1 = arith.constant 0 : index
    %c0_2 = arith.constant 0 : index
    %2 = vector.load %arg2[%c0_1, %c0_2] : memref<32x128xbf16, #tpu.memory_space<vmem>>, vector<32x128xbf16>
    %c0_3 = arith.constant 0 : index
    %c0_4 = arith.constant 0 : index
    %3 = vector.load %arg3[%c0_3, %c0_4] : memref<1x128xf32, #tpu.memory_space<vmem>>, vector<1x128xf32>
    %cst = arith.constant dense<0.000000e+00> : vector<16x128xf32>
    %4 = tpu.matmul %1, %2, %cst {dimension_numbers = #tpu.dot_dimension_numbers<[1], [0], [0], [1], [0, 0, 1, 1], [], []>} : vector<16x32xbf16>, vector<32x128xbf16>, vector<16x128xf32> -> vector<16x128xf32>
    %5 = vector.broadcast %3 : vector<1x128xf32> to vector<16x128xf32>
    %6 = arith.addf %4, %5 : vector<16x128xf32>
    %cst_5 = arith.constant 5.000000e-01 : f32
    %7 = vector.broadcast %cst_5 : f32 to vector<16x128xf32>
    %8 = arith.mulf %7, %6 : vector<16x128xf32>
    %cst_6 = arith.constant 0.707106769 : f32
    %9 = vector.broadcast %cst_6 : f32 to vector<16x128xf32>
    %10 = arith.mulf %6, %9 : vector<16x128xf32>
    %11 = math.erf %10 : vector<16x128xf32>
    %cst_7 = arith.constant 1.000000e+00 : f32
    %12 = vector.broadcast %cst_7 : f32 to vector<16x128xf32>
    %13 = arith.addf %12, %11 : vector<16x128xf32>
    %14 = arith.mulf %8, %13 : vector<16x128xf32>
    %15 = arith.truncf %14 : vector<16x128xf32> to vector<16x128xbf16>
    %c0_8 = arith.constant 0 : index
    %c0_9 = arith.constant 0 : index
    %16 = vector.load %arg4[%c0_8, %c0_9] : memref<128x128xbf16, #tpu.memory_space<vmem>>, vector<128x128xbf16>
    %c0_10 = arith.constant 0 : index
    %c0_11 = arith.constant 0 : index
    %17 = vector.load %arg5[%c0_10, %c0_11] : memref<1x128xf32, #tpu.memory_space<vmem>>, vector<1x128xf32>
    %cst_12 = arith.constant dense<0.000000e+00> : vector<16x128xf32>
    %18 = tpu.matmul %15, %16, %cst_12 {dimension_numbers = #tpu.dot_dimension_numbers<[1], [0], [0], [1], [0, 0, 1, 1], [], []>} : vector<16x128xbf16>, vector<128x128xbf16>, vector<16x128xf32> -> vector<16x128xf32>
    %19 = vector.broadcast %17 : vector<1x128xf32> to vector<16x128xf32>
    %20 = arith.addf %18, %19 : vector<16x128xf32>
    %cst_13 = arith.constant 5.000000e-01 : f32
    %21 = vector.broadcast %cst_13 : f32 to vector<16x128xf32>
    %22 = arith.mulf %21, %20 : vector<16x128xf32>
    %cst_14 = arith.constant 0.707106769 : f32
    %23 = vector.broadcast %cst_14 : f32 to vector<16x128xf32>
    %24 = arith.mulf %20, %23 : vector<16x128xf32>
    %25 = math.erf %24 : vector<16x128xf32>
    %cst_15 = arith.constant 1.000000e+00 : f32
    %26 = vector.broadcast %cst_15 : f32 to vector<16x128xf32>
    %27 = arith.addf %26, %25 : vector<16x128xf32>
    %28 = arith.mulf %22, %27 : vector<16x128xf32>
    %29 = arith.truncf %28 : vector<16x128xf32> to vector<16x128xbf16>
    %c0_16 = arith.constant 0 : index
    %c0_17 = arith.constant 0 : index
    %30 = vector.load %arg6[%c0_16, %c0_17] : memref<128x128xbf16, #tpu.memory_space<vmem>>, vector<128x128xbf16>
    %c0_18 = arith.constant 0 : index
    %c0_19 = arith.constant 0 : index
    %31 = vector.load %arg7[%c0_18, %c0_19] : memref<1x128xf32, #tpu.memory_space<vmem>>, vector<1x128xf32>
    %cst_20 = arith.constant dense<0.000000e+00> : vector<16x128xf32>
    %32 = tpu.matmul %29, %30, %cst_20 {dimension_numbers = #tpu.dot_dimension_numbers<[1], [0], [0], [1], [0, 0, 1, 1], [], []>} : vector<16x128xbf16>, vector<128x128xbf16>, vector<16x128xf32> -> vector<16x128xf32>
    %33 = vector.broadcast %31 : vector<1x128xf32> to vector<16x128xf32>
    %34 = arith.addf %32, %33 : vector<16x128xf32>
    %cst_21 = arith.constant 0.000000e+00 : f32
    %35 = vector.broadcast %cst_21 : f32 to vector<16x128xf32>
    %36 = arith.maximumf %34, %35 : vector<16x128xf32>
    %37 = arith.truncf %36 : vector<16x128xf32> to vector<16x128xbf16>
    %c0_22 = arith.constant 0 : index
    %c0_23 = arith.constant 0 : index
    %38 = vector.load %arg8[%c0_22, %c0_23] : memref<16x128xbf16, #tpu.memory_space<vmem>>, vector<16x128xbf16>
    tpu.vector_store %arg8[%c0_22, %c0_23], %37 {strides = array<i32>} : memref<16x128xbf16, #tpu.memory_space<vmem>>, vector<16x128xbf16>,
    return
  }
  func.func @transform_0(%arg0: i32) -> (i32, i32) {
    %c0_i32 = arith.constant 0 : i32
    %c0_i32_0 = arith.constant 0 : i32
    return %arg0, %c0_i32 : i32, i32
  }
  func.func @transform_1(%arg0: i32) -> (i32, i32) {
    %c0_i32 = arith.constant 0 : i32
    %c0_i32_0 = arith.constant 0 : i32
    %c0_i32_1 = arith.constant 0 : i32
    return %c0_i32, %c0_i32_0 : i32, i32
  }
  func.func @transform_2(%arg0: i32) -> (i32, i32) {
    %c0_i32 = arith.constant 0 : i32
    %c0_i32_0 = arith.constant 0 : i32
    %c0_i32_1 = arith.constant 0 : i32
    return %c0_i32, %c0_i32_0 : i32, i32
  }
  func.func @transform_3(%arg0: i32) -> (i32, i32) {
    %c0_i32 = arith.constant 0 : i32
    %c0_i32_0 = arith.constant 0 : i32
    %c0_i32_1 = arith.constant 0 : i32
    return %c0_i32, %c0_i32_0 : i32, i32
  }
  func.func @transform_4(%arg0: i32) -> (i32, i32) {
    %c0_i32 = arith.constant 0 : i32
    %c0_i32_0 = arith.constant 0 : i32
    %c0_i32_1 = arith.constant 0 : i32
    return %c0_i32, %c0_i32_0 : i32, i32
  }
  func.func @transform_5(%arg0: i32) -> (i32, i32) {
    %c0_i32 = arith.constant 0 : i32
    %c0_i32_0 = arith.constant 0 : i32
    %c0_i32_1 = arith.constant 0 : i32
    return %c0_i32, %c0_i32_0 : i32, i32
  }
  func.func @transform_6(%arg0: i32) -> (i32, i32) {
    %c0_i32 = arith.constant 0 : i32
    %c0_i32_0 = arith.constant 0 : i32
    %c0_i32_1 = arith.constant 0 : i32
    return %c0_i32, %c0_i32_0 : i32, i32
  }
  func.func @transform_7(%arg0: i32) -> (i32, i32) {
    %c0_i32 = arith.constant 0 : i32
    %c0_i32_0 = arith.constant 0 : i32
    return %arg0, %c0_i32 : i32, i32
  }
}

</mosaic_0001>

<llo_original>
// kernel: net_forward.1
$region0: #{net_forward.1}
  #allocation0 [shape = 'u32[]', space=smem, size = 0x4, offset = 0x4, fixed_abs, tag = 'smem constant byte address 0x4 - core index']
  #allocation1 [shape = 'u32[72,128]{1,0:T(1,128)}', space=vmem, size = 0x9000, scoped, tag = 'internal scratch']
  %s0 = inlined_call_operand.hbm [shape: f32[16,32], index: 0, kind: input, shape index: {}]
  %s1 = inlined_call_operand.hbm [shape: bf16[32,128], index: 1, kind: input, shape index: {}]
  %s2 = inlined_call_operand.vmem [shape: f32[1,128], index: 2, kind: input, shape index: {}]
  %s3 = inlined_call_operand.hbm [shape: bf16[128,128], index: 3, kind: input, shape index: {}]
  %s4 = inlined_call_operand.vmem [shape: f32[1,128], index: 4, kind: input, shape index: {}]
  %s5 = inlined_call_operand.hbm [shape: bf16[128,128], index: 5, kind: input, shape index: {}]
  %s6 = inlined_call_operand.vmem [shape: f32[1,128], index: 6, kind: input, shape index: {}]
  %s7 = inlined_call_operand.vmem [shape: bf16[16,128], index: 7, kind: output, shape index: {}]
  %s8 = sld [smem:[#allocation0]]
  $region54: #{net_forward.1} parent=0
    _
  %s10 = ssub.s32 1, %s8
  %s11 = scalar_select 0, %s10, %s8
  $region1: #{net_forward.1} parent=0
    #allocation2 [shape = 'u8[8192]{0}', space=vmem, size = 0x2000, scoped, tag = 'input window, operand 0, single buffered']
    #allocation3 [shape = 's32[1]{0}', space=sflag, size = 0x4, scoped, tag = 'scoped memory for net_forward.1']
    #allocation4 [shape = 'u8[8192]{0}', space=vmem, size = 0x2000, scoped, tag = 'input window, operand 1, single buffered']
    #allocation5 [shape = 's32[1]{0}', space=sflag, size = 0x4, scoped, tag = 'scoped memory for net_forward.1']
    #allocation6 [shape = 'u8[32768]{0}', space=vmem, size = 0x8000, scoped, tag = 'input window, operand 3, single buffered']
    #allocation7 [shape = 'u8[32768]{0}', space=vmem, size = 0x8000, scoped, tag = 'input window, operand 5, single buffered']
    #allocation8 [shape = 's32[1]{0}', space=sflag, size = 0x4, scoped, tag = 'scoped memory for net_forward.1']
    %12 = vsyncpa [#allocation3], 0
    %13 = vsyncpa [#allocation5], 0
    %14 = vsyncpa [#allocation8], 0
    // Predicated region
    $region2: #{net_forward.1} parent=1 // pred_check
      _
    $region3: #{net_forward.1} parent=1 // pred_check_branch
      %16 = sbr.rel (0) target = $region5
    $region4: #{net_forward.1} parent=1 // pred_region
      %18 = vsyncadd [#allocation3], 0
      %s19 = sshll.u32 %s0, 4
      %s20 = int_to_ptr.hbm [resolvable:$true] %s19
      %s21 = sshll.u32 [#allocation2], 4
      %s22 = int_to_ptr.vmem [resolvable:$true] %s21
      %27 = dma.hbm_to_vmem [thread:$0]  %s20, 256, %s22, [#allocation3], 128, 128, 8
    $region5: #{net_forward.1} parent=1 // pred_fallthru
      _
    // Predicated region
    $region6: #{net_forward.1} parent=1 // pred_check
      _
    $region7: #{net_forward.1} parent=1 // pred_check_branch
      %29 = sbr.rel (0) target = $region9
    $region8: #{net_forward.1} parent=1 // pred_region
      %31 = vsyncadd [#allocation5], 0
      %s32 = sshll.u32 %s1, 4
      %s33 = int_to_ptr.hbm [resolvable:$true] %s32
      %s34 = sshll.u32 [#allocation4], 4
      %s35 = int_to_ptr.vmem [resolvable:$true] %s34
      %40 = dma.hbm_to_vmem [thread:$0]  %s33, 256, %s35, [#allocation5], 64, 64, 4
    $region9: #{net_forward.1} parent=1 // pred_fallthru
      _
    // Predicated region
    $region10: #{net_forward.1} parent=1 // pred_check
      _
    $region11: #{net_forward.1} parent=1 // pred_check_branch
      %42 = sbr.rel (0) target = $region13
    $region12: #{net_forward.1} parent=1 // pred_region
      _
    $region13: #{net_forward.1} parent=1 // pred_fallthru
      _
    // Predicated region
    $region14: #{net_forward.1} parent=1 // pred_check
      _
    $region15: #{net_forward.1} parent=1 // pred_check_branch
      %44 = sbr.rel (0) target = $region17
    $region16: #{net_forward.1} parent=1 // pred_region
      %46 = vsyncadd [#allocation5], 0
      %s47 = sshll.u32 %s3, 4
      %s48 = int_to_ptr.hbm [resolvable:$true] %s47
      %s49 = sshll.u32 [#allocation6], 4
      %s50 = int_to_ptr.vmem [resolvable:$true] %s49
      %55 = dma.hbm_to_vmem [thread:$0]  %s48, 1024, %s50, [#allocation5], 64, 64, 4
    $region17: #{net_forward.1} parent=1 // pred_fallthru
      _
    // Predicated region
    $region18: #{net_forward.1} parent=1 // pred_check
      _
    $region19: #{net_forward.1} parent=1 // pred_check_branch
      %57 = sbr.rel (0) target = $region21
    $region20: #{net_forward.1} parent=1 // pred_region
      _
    $region21: #{net_forward.1} parent=1 // pred_fallthru
      _
    // Predicated region
    $region22: #{net_forward.1} parent=1 // pred_check
      _
    $region23: #{net_forward.1} parent=1 // pred_check_branch
      %59 = sbr.rel (0) target = $region25
    $region24: #{net_forward.1} parent=1 // pred_region
      %61 = vsyncadd [#allocation8], 0
      %s62 = sshll.u32 %s5, 4
      %s63 = int_to_ptr.hbm [resolvable:$true] %s62
      %s64 = sshll.u32 [#allocation7], 4
      %s65 = int_to_ptr.vmem [resolvable:$true] %s64
      %70 = dma.hbm_to_vmem [thread:$0]  %s63, 1024, %s65, [#allocation8], 64, 64, 4
    $region25: #{net_forward.1} parent=1 // pred_fallthru
      _
    // Predicated region
    $region26: #{net_forward.1} parent=1 // pred_check
      _
    $region27: #{net_forward.1} parent=1 // pred_check_branch
      %72 = sbr.rel (0) target = $region29
    $region28: #{net_forward.1} parent=1 // pred_region
      _
    $region29: #{net_forward.1} parent=1 // pred_fallthru
      _
    // Predicated region
    $region30: #{net_forward.1} parent=1 // pred_check
      _
    $region31: #{net_forward.1} parent=1 // pred_check_branch
      %74 = sbr.rel (0) target = $region33
    $region32: #{net_forward.1} parent=1 // pred_region
      %76 = dma.done [#allocation3], 256
    $region33: #{net_forward.1} parent=1 // pred_fallthru
      _
    // Predicated region
    $region34: #{net_forward.1} parent=1 // pred_check
      _
    $region35: #{net_forward.1} parent=1 // pred_check_branch
      %78 = sbr.rel (0) target = $region37
    $region36: #{net_forward.1} parent=1 // pred_region
      %80 = dma.done [#allocation5], 256
    $region37: #{net_forward.1} parent=1 // pred_fallthru
      _
    // Predicated region
    $region38: #{net_forward.1} parent=1 // pred_check
      _
    $region39: #{net_forward.1} parent=1 // pred_check_branch
      %82 = sbr.rel (0) target = $region41
    $region40: #{net_forward.1} parent=1 // pred_region
      %84 = dma.done [#allocation5], 1024
    $region41: #{net_forward.1} parent=1 // pred_fallthru
      _
    // Predicated region
    $region42: #{net_forward.1} parent=1 // pred_check
      _
    $region43: #{net_forward.1} parent=1 // pred_check_branch
      %86 = sbr.rel (0) target = $region45
    $region44: #{net_forward.1} parent=1 // pred_region
      %88 = dma.done [#allocation8], 1024
    $region45: #{net_forward.1} parent=1 // pred_fallthru
      _
    %v90 = vld [vmem:[#allocation2] sm:$0xff]
    %v91 = vld [vmem:[#allocation2 + $0x8] sm:$0xff]
    %v92 = vpack.c.bf16 %v91, %v90
    %v93 = vld [vmem:[#allocation4] sm:$0xf]
    %v94 = vld [vmem:[#allocation4 + $0x4] sm:$0xf]
    %v95 = vld [vmem:[#allocation4 + $0x8] sm:$0xf]
    %v96 = vld [vmem:[#allocation4 + $0xc] sm:$0xf]
    %v97 = vld [vmem:[%s2] sm:$0x1]
    %v99 = vperm.slane %v97, 0
    %v105 = vunpack.c.l.b16 %v93
    %v106 = vunpack.c.l.b16 %v94
    %v107 = vunpack.c.l.b16 %v95
    %v108 = vunpack.c.l.b16 %v96
    %v109 = vpack.c.b16 %v106, %v105
    %v110 = vpack.c.b16 %v108, %v107
    %vm113 = vcmask 261120
    %v115 = vsel %vm113, %v92, 0
    %117 = vmatpush.bf16.msra.mxu0 0
    %118 = vmatpush.bf16.msra.mxu0 0
    %119 = vmatpush.bf16.msra.mxu0 0
    %120 = vmatpush.bf16.msra.mxu0 0
    %121 = vmatpush.bf16.msra.mxu0 0
    %122 = vmatpush.bf16.msra.mxu0 0
    %123 = vmatpush.bf16.msra.mxu0 %v110
    %124 = vmatpush.bf16.msra.mxu0 %v109
    %125 = vmatmul.bf16.gmra.mxu0 %v115
    %v126 = vpop.f32.mrf.mxu0
    %v127 = vadd.f32 %v99, %v126
    %v128 = vpop.f32.mrf.mxu0
    %v129 = vadd.f32 %v99, %v128
    %130 = vdwg.mxu0
    %v131 = vmul.f32 %v127, 0.5
    %v132 = vmul.f32 %v129, 0.5
    %v133 = vmul.f32 %v127, 0.70710677
    %v134 = vmul.f32 %v129, 0.70710677
    %v135 = vmul.f32 %v133, %v133
    %v136 = vmin.f32 16.0, %v135
    %v137 = vmul.f32 %v136, 2.1237322e-06
    %v138 = vadd.f32 %v137, 0.00028619796
    %v139 = vmul.f32 %v136, %v138
    %v140 = vadd.f32 %v139, 0.0036580483
    %v141 = vmul.f32 %v136, %v140
    %v142 = vadd.f32 %v141, 0.05243302
    %v143 = vmul.f32 %v136, %v142
    %v144 = vadd.f32 %v143, 0.18741608
    %v145 = vmul.f32 %v136, %v144
    %v146 = vadd.f32 %v145, 1.1283791
    %v147 = vmul.f32 %v133, %v146
    %v148 = vmul.f32 %v136, 3.8918573e-05
    %v149 = vadd.f32 %v148, 0.001143296
    %v150 = vmul.f32 %v136, %v149
    %v151 = vadd.f32 %v150, 0.014752088
    %v152 = vmul.f32 %v136, %v151
    %v153 = vadd.f32 %v152, 0.112945676
    %v154 = vmul.f32 %v136, %v153
    %v155 = vadd.f32 %v154, 0.4994258
    %v156 = vmul.f32 %v136, %v155
    %v157 = vadd.f32 %v156, 1.0
    %v158 = vrcp.pop %v157
    %v159 = vmul.f32 %v157, %v158
    %v160 = vsub.f32 1.0, %v159
    %v161 = vmul.f32 %v158, %v160
    %v162 = vadd.f32 %v158, %v161
    %vm163 = vweird.f32 %v157
    %vm164 = vweird.f32 %v158
    %vm165 = vmor %vm163, %vm164
    %v166 = vsel %vm165, %v158, %v162
    %v167 = vand.u32 2147483647, %v157
    %vm168 = vcmp.eq.f32.partialorder %v167, 8.507059e+37
    %v169 = vand.u32 %v157, 2147483648
    %v170 = vor.u32 1.1754944e-38, %v169
    %v171 = vsel %vm168, %v170, %v166
    %v172 = vmul.f32 %v147, %v171
    %v173 = vmin.f32 %v172, 1.0
    %v174 = vmax.f32 %v173, -1.0
    %v175 = vmul.f32 %v134, %v134
    %v176 = vmin.f32 16.0, %v175
    %v177 = vmul.f32 %v176, 2.1237322e-06
    %v178 = vadd.f32 %v177, 0.00028619796
    %v179 = vmul.f32 %v176, %v178
    %v180 = vadd.f32 %v179, 0.0036580483
    %v181 = vmul.f32 %v176, %v180
    %v182 = vadd.f32 %v181, 0.05243302
    %v183 = vmul.f32 %v176, %v182
    %v184 = vadd.f32 %v183, 0.18741608
    %v185 = vmul.f32 %v176, %v184
    %v186 = vadd.f32 %v185, 1.1283791
    %v187 = vmul.f32 %v134, %v186
    %v188 = vmul.f32 %v176, 3.8918573e-05
    %v189 = vadd.f32 %v188, 0.001143296
    %v190 = vmul.f32 %v176, %v189
    %v191 = vadd.f32 %v190, 0.014752088
    %v192 = vmul.f32 %v176, %v191
    %v193 = vadd.f32 %v192, 0.112945676
    %v194 = vmul.f32 %v176, %v193
    %v195 = vadd.f32 %v194, 0.4994258
    %v196 = vmul.f32 %v176, %v195
    %v197 = vadd.f32 %v196, 1.0
    %v198 = vrcp.pop %v197
    %v199 = vmul.f32 %v197, %v198
    %v200 = vsub.f32 1.0, %v199
    %v201 = vmul.f32 %v198, %v200
    %v202 = vadd.f32 %v198, %v201
    %vm203 = vweird.f32 %v197
    %vm204 = vweird.f32 %v198
    %vm205 = vmor %vm203, %vm204
    %v206 = vsel %vm205, %v198, %v202
    %v207 = vand.u32 2147483647, %v197
    %vm208 = vcmp.eq.f32.partialorder %v207, 8.507059e+37
    %v209 = vand.u32 %v197, 2147483648
    %v210 = vor.u32 1.1754944e-38, %v209
    %v211 = vsel %vm208, %v210, %v206
    %v212 = vmul.f32 %v187, %v211
    %v213 = vmin.f32 %v212, 1.0
    %v214 = vmax.f32 %v213, -1.0
    %v215 = vadd.f32 %v174, 1.0
    %v216 = vadd.f32 %v214, 1.0
    %v217 = vmul.f32 %v131, %v215
    %v218 = vmul.f32 %v132, %v216
    %v219 = vpack.c.bf16 %v218, %v217
    %v220 = vld [vmem:[#allocation6] sm:$0xf]
    %v221 = vld [vmem:[#allocation6 + $0x4] sm:$0xf]
    %v222 = vld [vmem:[#allocation6 + $0x8] sm:$0xf]
    %v223 = vld [vmem:[#allocation6 + $0xc] sm:$0xf]
    %v224 = vld [vmem:[#allocation6 + $0x10] sm:$0xf]
    %v225 = vld [vmem:[#allocation6 + $0x14] sm:$0xf]
    %v226 = vld [vmem:[#allocation6 + $0x18] sm:$0xf]
    %v227 = vld [vmem:[#allocation6 + $0x1c] sm:$0xf]
    %v228 = vld [vmem:[#allocation6 + $0x20] sm:$0xf]
    %v229 = vld [vmem:[#allocation6 + $0x24] sm:$0xf]
    %v230 = vld [vmem:[#allocation6 + $0x28] sm:$0xf]
    %v231 = vld [vmem:[#allocation6 + $0x2c] sm:$0xf]
    %v232 = vld [vmem:[#allocation6 + $0x30] sm:$0xf]
    %v233 = vld [vmem:[#allocation6 + $0x34] sm:$0xf]
    %v234 = vld [vmem:[#allocation6 + $0x38] sm:$0xf]
    %v235 = vld [vmem:[#allocation6 + $0x3c] sm:$0xf]
    %v236 = vld [vmem:[%s4] sm:$0x1]
    %v238 = vperm.slane %v236, 0
    %v256 = vunpack.c.l.b16 %v220
    %v257 = vunpack.c.l.b16 %v221
    %v258 = vunpack.c.l.b16 %v222
    %v259 = vunpack.c.l.b16 %v223
    %v260 = vunpack.c.l.b16 %v224
    %v261 = vunpack.c.l.b16 %v225
    %v262 = vunpack.c.l.b16 %v226
    %v263 = vunpack.c.l.b16 %v227
    %v264 = vunpack.c.l.b16 %v228
    %v265 = vunpack.c.l.b16 %v229
    %v266 = vunpack.c.l.b16 %v230
    %v267 = vunpack.c.l.b16 %v231
    %v268 = vunpack.c.l.b16 %v232
    %v269 = vunpack.c.l.b16 %v233
    %v270 = vunpack.c.l.b16 %v234
    %v271 = vunpack.c.l.b16 %v235
    %v272 = vpack.c.b16 %v257, %v256
    %v273 = vpack.c.b16 %v259, %v258
    %v274 = vpack.c.b16 %v261, %v260
    %v275 = vpack.c.b16 %v263, %v262
    %v276 = vpack.c.b16 %v265, %v264
    %v277 = vpack.c.b16 %v267, %v266
    %v278 = vpack.c.b16 %v269, %v268
    %v279 = vpack.c.b16 %v271, %v270
    %288 = vmatpush.bf16.msra.mxu0 %v279
    %289 = vmatpush.bf16.msra.mxu0 %v278
    %290 = vmatpush.bf16.msra.mxu0 %v277
    %291 = vmatpush.bf16.msra.mxu0 %v276
    %292 = vmatpush.bf16.msra.mxu0 %v275
    %293 = vmatpush.bf16.msra.mxu0 %v274
    %294 = vmatpush.bf16.msra.mxu0 %v273
    %295 = vmatpush.bf16.msra.mxu0 %v272
    %296 = vmatmul.bf16.gmra.mxu0 %v219
    %v297 = vpop.f32.mrf.mxu0
    %v298 = vadd.f32 %v238, %v297
    %v299 = vpop.f32.mrf.mxu0
    %v300 = vadd.f32 %v238, %v299
    %301 = vdwg.mxu0
    %v302 = vmul.f32 %v298, 0.5
    %v303 = vmul.f32 %v300, 0.5
    %v304 = vmul.f32 %v298, 0.70710677
    %v305 = vmul.f32 %v300, 0.70710677
    %v306 = vmul.f32 %v304, %v304
    %v307 = vmin.f32 16.0, %v306
    %v308 = vmul.f32 %v307, 2.1237322e-06
    %v309 = vadd.f32 %v308, 0.00028619796
    %v310 = vmul.f32 %v307, %v309
    %v311 = vadd.f32 %v310, 0.0036580483
    %v312 = vmul.f32 %v307, %v311
    %v313 = vadd.f32 %v312, 0.05243302
    %v314 = vmul.f32 %v307, %v313
    %v315 = vadd.f32 %v314, 0.18741608
    %v316 = vmul.f32 %v307, %v315
    %v317 = vadd.f32 %v316, 1.1283791
    %v318 = vmul.f32 %v304, %v317
    %v319 = vmul.f32 %v307, 3.8918573e-05
    %v320 = vadd.f32 %v319, 0.001143296
    %v321 = vmul.f32 %v307, %v320
    %v322 = vadd.f32 %v321, 0.014752088
    %v323 = vmul.f32 %v307, %v322
    %v324 = vadd.f32 %v323, 0.112945676
    %v325 = vmul.f32 %v307, %v324
    %v326 = vadd.f32 %v325, 0.4994258
    %v327 = vmul.f32 %v307, %v326
    %v328 = vadd.f32 %v327, 1.0
    %v329 = vrcp.pop %v328
    %v330 = vmul.f32 %v328, %v329
    %v331 = vsub.f32 1.0, %v330
    %v332 = vmul.f32 %v329, %v331
    %v333 = vadd.f32 %v329, %v332
    %vm334 = vweird.f32 %v328
    %vm335 = vweird.f32 %v329
    %vm336 = vmor %vm334, %vm335
    %v337 = vsel %vm336, %v329, %v333
    %v338 = vand.u32 2147483647, %v328
    %vm339 = vcmp.eq.f32.partialorder %v338, 8.507059e+37
    %v340 = vand.u32 %v328, 2147483648
    %v341 = vor.u32 1.1754944e-38, %v340
    %v342 = vsel %vm339, %v341, %v337
    %v343 = vmul.f32 %v318, %v342
    %v344 = vmin.f32 %v343, 1.0
    %v345 = vmax.f32 %v344, -1.0
    %v346 = vmul.f32 %v305, %v305
    %v347 = vmin.f32 16.0, %v346
    %v348 = vmul.f32 %v347, 2.1237322e-06
    %v349 = vadd.f32 %v348, 0.00028619796
    %v350 = vmul.f32 %v347, %v349
    %v351 = vadd.f32 %v350, 0.0036580483
    %v352 = vmul.f32 %v347, %v351
    %v353 = vadd.f32 %v352, 0.05243302
    %v354 = vmul.f32 %v347, %v353
    %v355 = vadd.f32 %v354, 0.18741608
    %v356 = vmul.f32 %v347, %v355
    %v357 = vadd.f32 %v356, 1.1283791
    %v358 = vmul.f32 %v305, %v357
    %v359 = vmul.f32 %v347, 3.8918573e-05
    %v360 = vadd.f32 %v359, 0.001143296
    %v361 = vmul.f32 %v347, %v360
    %v362 = vadd.f32 %v361, 0.014752088
    %v363 = vmul.f32 %v347, %v362
    %v364 = vadd.f32 %v363, 0.112945676
    %v365 = vmul.f32 %v347, %v364
    %v366 = vadd.f32 %v365, 0.4994258
    %v367 = vmul.f32 %v347, %v366
    %v368 = vadd.f32 %v367, 1.0
    %v369 = vrcp.pop %v368
    %v370 = vmul.f32 %v368, %v369
    %v371 = vsub.f32 1.0, %v370
    %v372 = vmul.f32 %v369, %v371
    %v373 = vadd.f32 %v369, %v372
    %vm374 = vweird.f32 %v368
    %vm375 = vweird.f32 %v369
    %vm376 = vmor %vm374, %vm375
    %v377 = vsel %vm376, %v369, %v373
    %v378 = vand.u32 2147483647, %v368
    %vm379 = vcmp.eq.f32.partialorder %v378, 8.507059e+37
    %v380 = vand.u32 %v368, 2147483648
    %v381 = vor.u32 1.1754944e-38, %v380
    %v382 = vsel %vm379, %v381, %v377
    %v383 = vmul.f32 %v358, %v382
    %v384 = vmin.f32 %v383, 1.0
    %v385 = vmax.f32 %v384, -1.0
    %v386 = vadd.f32 %v345, 1.0
    %v387 = vadd.f32 %v385, 1.0
    %v388 = vmul.f32 %v302, %v386
    %v389 = vmul.f32 %v303, %v387
    %v390 = vpack.c.bf16 %v389, %v388
    %v391 = vld [vmem:[#allocation7] sm:$0xf]
    %v392 = vld [vmem:[#allocation7 + $0x4] sm:$0xf]
    %v393 = vld [vmem:[#allocation7 + $0x8] sm:$0xf]
    %v394 = vld [vmem:[#allocation7 + $0xc] sm:$0xf]
    %v395 = vld [vmem:[#allocation7 + $0x10] sm:$0xf]
    %v396 = vld [vmem:[#allocation7 + $0x14] sm:$0xf]
    %v397 = vld [vmem:[#allocation7 + $0x18] sm:$0xf]
    %v398 = vld [vmem:[#allocation7 + $0x1c] sm:$0xf]
    %v399 = vld [vmem:[#allocation7 + $0x20] sm:$0xf]
    %v400 = vld [vmem:[#allocation7 + $0x24] sm:$0xf]
    %v401 = vld [vmem:[#allocation7 + $0x28] sm:$0xf]
    %v402 = vld [vmem:[#allocation7 + $0x2c] sm:$0xf]
    %v403 = vld [vmem:[#allocation7 + $0x30] sm:$0xf]
    %v404 = vld [vmem:[#allocation7 + $0x34] sm:$0xf]
    %v405 = vld [vmem:[#allocation7 + $0x38] sm:$0xf]
    %v406 = vld [vmem:[#allocation7 + $0x3c] sm:$0xf]
    %v407 = vld [vmem:[%s6] sm:$0x1]
    %v409 = vperm.slane %v407, 0
    %v427 = vunpack.c.l.b16 %v391
    %v428 = vunpack.c.l.b16 %v392
    %v429 = vunpack.c.l.b16 %v393
    %v430 = vunpack.c.l.b16 %v394
    %v431 = vunpack.c.l.b16 %v395
    %v432 = vunpack.c.l.b16 %v396
    %v433 = vunpack.c.l.b16 %v397
    %v434 = vunpack.c.l.b16 %v398
    %v435 = vunpack.c.l.b16 %v399
    %v436 = vunpack.c.l.b16 %v400
    %v437 = vunpack.c.l.b16 %v401
    %v438 = vunpack.c.l.b16 %v402
    %v439 = vunpack.c.l.b16 %v403
    %v440 = vunpack.c.l.b16 %v404
    %v441 = vunpack.c.l.b16 %v405
    %v442 = vunpack.c.l.b16 %v406
    %v443 = vpack.c.b16 %v428, %v427
    %v444 = vpack.c.b16 %v430, %v429
    %v445 = vpack.c.b16 %v432, %v431
    %v446 = vpack.c.b16 %v434, %v433
    %v447 = vpack.c.b16 %v436, %v435
    %v448 = vpack.c.b16 %v438, %v437
    %v449 = vpack.c.b16 %v440, %v439
    %v450 = vpack.c.b16 %v442, %v441
    %459 = vmatpush.bf16.msra.mxu0 %v450
    %460 = vmatpush.bf16.msra.mxu0 %v449
    %461 = vmatpush.bf16.msra.mxu0 %v448
    %462 = vmatpush.bf16.msra.mxu0 %v447
    %463 = vmatpush.bf16.msra.mxu0 %v446
    %464 = vmatpush.bf16.msra.mxu0 %v445
    %465 = vmatpush.bf16.msra.mxu0 %v444
    %466 = vmatpush.bf16.msra.mxu0 %v443
    %467 = vmatmul.bf16.gmra.mxu0 %v390
    %v468 = vpop.f32.mrf.mxu0
    %v469 = vadd.f32 %v409, %v468
    %v470 = vpop.f32.mrf.mxu0
    %v471 = vadd.f32 %v409, %v470
    %472 = vdwg.mxu0
    %v473 = vmax.f32 %v469, 0.0
    %v474 = vmax.f32 %v471, 0.0
    %v475 = vpack.c.bf16 %v473, %v473
    %v476 = vpack.c.bf16 %v474, %v474
    %477 = vst [vmem:[%s7] sm:$0xf] %v475
    %478 = vst [vmem:[%s7 + $0x4] sm:$0xf] %v476
    // Predicated region
    $region46: #{net_forward.1} parent=1 // pred_check
      _
    $region47: #{net_forward.1} parent=1 // pred_check_branch
      %480 = sbr.rel (0) target = $region49
    $region48: #{net_forward.1} parent=1 // pred_region
      _
    $region49: #{net_forward.1} parent=1 // pred_fallthru
      _
    // Predicated region
    $region50: #{net_forward.1} parent=1 // pred_check
      _
    $region51: #{net_forward.1} parent=1 // pred_check_branch
      %482 = sbr.rel (0) target = $region53
    $region52: #{net_forward.1} parent=1 // pred_region
      _
    $region53: #{net_forward.1} parent=1 // pred_fallthru
      _
    %483 = vsyncpa [#allocation3], 1
    %484 = vsyncpa [#allocation5], 1
    %485 = vsyncpa [#allocation8], 1

</llo_original>
